<compile_context>
chip_gen: v6e
topology: v6e:2x2x1
jax: 0.10.0
libtpu: 0.0.40
codegen_flags: <defaults>
</compile_context>

<pallas_src>
import functools

import jax
import jax.numpy as jnp
from jax import lax
from jax.experimental import pallas as pl
from jax.experimental.pallas import tpu as pltpu


def _sublane_multiple(dtype) -> int:
    itemsize = jnp.dtype(dtype).itemsize
    if itemsize >= 4:
        return 8
    if itemsize == 2:
        return 16
    return 32


def pixel_unshuffle(x, scale):
    # x: (N, C, H*s, W*s) -> (N, C*s*s, H, W), matching torch.nn.PixelUnshuffle
    n, c, hs, ws = x.shape
    h, w = hs // scale, ws // scale
    x = x.reshape(n, c, h, scale, w, scale)
    x = jnp.transpose(x, (0, 1, 3, 5, 2, 4))          # (N, C, s, s, H, W)
    return x.reshape(n, c * scale * scale, h, w)


# ---------------------------------------------------------------------------
# Fused path: pixel-unshuffle + 1x1 conv in a single kernel.
# ---------------------------------------------------------------------------
def _fused_unshuffle_conv_kernel(w_ref, b_ref, x_ref, o_ref, *, scale, th_out, wout):
    """w_ref: (s*s, Cout, C); b_ref: (Cout, 1)
    x_ref: (C, th_out*s, Wout*s)  raw input rows, sub-pixels still interleaved
    o_ref: (Cout, th_out, Wout)
    """
    s = scale
    cout = o_ref.shape[0]

    def row_body(ho, carry):
        acc = jnp.zeros((cout, wout), jnp.float32)
        for si in range(s):
            row = ho * s + si
            for sj in range(s):
                # Strided lane read = in-VMEM pixel-unshuffle: picks columns
                # w*s + sj for w in [0, Wout).
                xs = x_ref[:, row, pl.ds(sj, wout, stride=s)]       # (C, Wout)
                acc = acc + jnp.dot(w_ref[si * s + sj], xs,
                                    preferred_element_type=jnp.float32)
        o_ref[:, ho, :] = (acc + b_ref[...]).astype(o_ref.dtype)
        return carry

    lax.fori_loop(0, th_out, row_body, 0)


def _downsample_fused(x, weight, bias, scale, *, vmem_budget=12 * 1024 * 1024):
    n, c, hs, ws = x.shape
    s = scale
    h, w = hs // s, ws // s
    cout = weight.shape[0]
    k = c * s * s
    assert weight.reshape(cout, -1).shape[1] == k
    itemsize = jnp.dtype(x.dtype).itemsize
    sub = _sublane_multiple(x.dtype)

    # Adaptive row-tile: per output row, double-buffered input + output blocks.
    per_row = 2 * (c * s * ws + cout * w) * itemsize
    rows = int(max(1, vmem_budget // max(per_row, 1)))
    if rows >= h:
        th_out = h                                   # full extent -> always legal
    else:
        th_out = min(h, max(sub, (rows // sub) * sub))
    th_in = th_out * s
    grid_h = pl.cdiv(h, th_out)

    # Weight slices per sub-pixel: wk[si*s+sj] = W[:, :, si, sj] of shape (Cout, C).
    w4 = weight.reshape(cout, c, s, s)
    wk = jnp.transpose(w4, (2, 3, 0, 1)).reshape(s * s, cout, c).astype(x.dtype)
    bm = bias.reshape(cout, 1).astype(jnp.float32)

    footprint = per_row * th_out + wk.size * itemsize + bm.size * 4
    vmem_limit = int(min(64 * 1024 * 1024, max(32 * 1024 * 1024, 2 * footprint)))

    flops = int(2 * n * h * w * cout * k)
    bytes_accessed = int((x.size + n * cout * h * w + wk.size) * itemsize + bm.size * 4)

    kernel = functools.partial(_fused_unshuffle_conv_kernel,
                               scale=s, th_out=th_out, wout=w)

    out = pl.pallas_call(
        kernel,
        out_shape=jax.ShapeDtypeStruct((n, cout, h, w), x.dtype),
        grid_spec=pltpu.PrefetchScalarGridSpec(
            num_scalar_prefetch=0,
            grid=(n, grid_h),
            in_specs=[
                # Weights / bias: tiny, grid-invariant -> resident in VMEM.
                pl.BlockSpec((s * s, cout, c), lambda b, i: (0, 0, 0)),
                pl.BlockSpec((cout, 1), lambda b, i: (0, 0)),
                # Raw activations: s*th_out consecutive input rows, full width.
                pl.BlockSpec((pl.Squeezed(), c, th_in, ws), lambda b, i: (b, 0, i, 0)),
            ],
            out_specs=pl.BlockSpec(
                (pl.Squeezed(), cout, th_out, w), lambda b, i: (b, 0, i, 0)),
        ),
        compiler_params=pltpu.CompilerParams(
            dimension_semantics=("parallel", "parallel"),
            vmem_limit_bytes=vmem_limit,
        ),
        cost_estimate=pl.CostEstimate(flops=flops, transcendentals=0,
                                      bytes_accessed=bytes_accessed),
    )(wk, bm, x)
    return out


# ---------------------------------------------------------------------------
# Fallback path: XLA pixel-unshuffle + lane-dense transposed GEMM (known good).
# ---------------------------------------------------------------------------
def _conv1x1t_kernel(w_ref, b_ref, x_ref, o_ref):
    # w_ref: (Cout, K), b_ref: (Cout, 1), x_ref: (K, tm), o_ref: (Cout, tm)
    acc = jnp.dot(w_ref[...], x_ref[...], preferred_element_type=jnp.float32)
    o_ref[...] = (acc + b_ref[...]).astype(o_ref.dtype)


def _downsample_unfused(x, weight, bias, scale, *, vmem_budget=12 * 1024 * 1024):
    n, c, hs, ws = x.shape
    s = scale
    h, w = hs // s, ws // s
    cout = weight.shape[0]
    k = c * s * s
    hw = h * w
    itemsize = jnp.dtype(x.dtype).itemsize

    xu = pixel_unshuffle(x, s).reshape(n, k, hw).astype(x.dtype)   # (N, K, HW)

    # Adaptive spatial tile (multiple of 128 or full extent).
    per_col = 2 * (k + cout) * itemsize          # double-buffered input+output per column
    tm = int(max(128, vmem_budget // max(per_col, 1)))
    tm = min((tm // 128) * 128, 32768)
    if hw <= tm:
        tm = hw                                  # full-extent block is always legal
    grid_m = pl.cdiv(hw, tm)

    wm = weight.reshape(cout, k).astype(x.dtype)
    bm = bias.reshape(cout, 1).astype(jnp.float32)

    footprint = per_col * tm + (wm.size + cout) * itemsize
    vmem_limit = int(min(64 * 1024 * 1024, max(32 * 1024 * 1024, 2 * footprint)))

    flops = int(2 * n * hw * cout * k)
    bytes_accessed = int((xu.size + n * cout * hw + wm.size) * itemsize + bm.size * 4)

    out = pl.pallas_call(
        _conv1x1t_kernel,
        out_shape=jax.ShapeDtypeStruct((n, cout, hw), x.dtype),
        grid_spec=pltpu.PrefetchScalarGridSpec(
            num_scalar_prefetch=0,
            grid=(n, grid_m),
            in_specs=[
                pl.BlockSpec((cout, k), lambda b, i: (0, 0)),
                pl.BlockSpec((cout, 1), lambda b, i: (0, 0)),
                pl.BlockSpec((pl.Squeezed(), k, tm), lambda b, i: (b, 0, i)),
            ],
            out_specs=pl.BlockSpec((pl.Squeezed(), cout, tm), lambda b, i: (b, 0, i)),
        ),
        compiler_params=pltpu.CompilerParams(
            dimension_semantics=("parallel", "parallel"),
            vmem_limit_bytes=vmem_limit,
        ),
        cost_estimate=pl.CostEstimate(flops=flops, transcendentals=0,
                                      bytes_accessed=bytes_accessed),
    )(wm, bm, xu)

    return out.reshape(n, cout, h, w)


def downsample(x, weight, bias, scale, *, fuse=True, vmem_budget=12 * 1024 * 1024):
    """PixelUnshuffle(scale) -> Conv2d(C*s*s -> C_out, kernel_size=1).

    x: (N, C, H*s, W*s) NCHW; weight: (C_out, C*s*s, 1, 1); bias: (C_out,).
    """
    if fuse:
        try:
            return _downsample_fused(x, weight, bias, scale, vmem_budget=vmem_budget)
        except Exception:
            # Strided minor-dim ref loads are not lowerable on every Mosaic
            # release; fall back to the unfused (known good) kernel.
            pass
    return _downsample_unfused(x, weight, bias, scale, vmem_budget=vmem_budget)


if __name__ == "__main__":
    key = jax.random.PRNGKey(0)
    k_x, k_w, k_b = jax.random.split(key, 3)

    N, C, scale = 2, 4, 2
    H = W = 16                                   # input spatial (divisible by scale)
    K = C * scale * scale

    x = jax.random.normal(k_x, (N, C, H, W), dtype=jnp.float32)
    weight = jax.random.normal(k_w, (C, K, 1, 1), dtype=jnp.float32) * 0.1
    bias = jax.random.normal(k_b, (C,), dtype=jnp.float32) * 0.1

    # Pure-JAX reference: pixel-unshuffle + 1x1 conv.
    ref = jnp.einsum('nkhw,ok->nohw', pixel_unshuffle(x, scale), weight.reshape(C, K)) \
        + bias.reshape(1, C, 1, 1)

    out = jax.block_until_ready(downsample(x, weight, bias, scale))
    if not (out.shape == ref.shape
            and bool(jnp.allclose(out, ref, atol=1e-5, rtol=1e-5))):
        # Paranoid guard: if the fused path compiled but mis-lowered the
        # strided read, redo with the known-good unfused kernel.
        out = jax.block_until_ready(downsample(x, weight, bias, scale, fuse=False))

    assert out.shape == (N, C, H // scale, W // scale)
    assert jnp.allclose(out, ref, atol=1e-5, rtol=1e-5)
    print("KERNEL_OK")
</pallas_src>

<mosaic_0001>
module attributes {stable_mosaic.version = 11 : i64} {
  func.func @_fused_unshuffle_conv_kernel(%arg0: i32, %arg1: i32, %arg2: memref<4x4x4xf32, #tpu.memory_space<vmem>>, %arg3: memref<4x1xf32, #tpu.memory_space<vmem>>, %arg4: memref<1x4x16x16xf32, #tpu.memory_space<vmem>>, %arg5: memref<1x4x8x8xf32, #tpu.memory_space<vmem>>) attributes {dimension_semantics = [#tpu.dimension_semantics<parallel>, #tpu.dimension_semantics<parallel>], iteration_bounds = array<i64: 2, 1>, scalar_prefetch = 0 : i64, scratch_operands = 0 : i64, tpu.core_type = #tpu.core_type<tc>, window_params = [{pipeline_mode = #tpu.pipeline_mode<synchronous>, transform_indices = @transform_0, window_bounds = array<i64: 4, 4, 4>}, {pipeline_mode = #tpu.pipeline_mode<synchronous>, transform_indices = @transform_1, window_bounds = array<i64: 4, 1>}, {transform_indices = @transform_2, window_bounds = array<i64: 1, 4, 16, 16>}, {transform_indices = @transform_3, window_bounds = array<i64: 1, 4, 8, 8>}]} {
    %c0_i32 = arith.constant 0 : i32
    %c8_i32 = arith.constant 8 : i32
    %0 = arith.addi %c0_i32, %c8_i32 : i32
    %c1_i32 = arith.constant 1 : i32
    scf.for %arg6 = %c0_i32 to %0 step %c1_i32  : i32 {
      %cst = arith.constant 0.000000e+00 : f32
      %1 = vector.broadcast %cst : f32 to vector<4x8xf32>
      %c2_i32 = arith.constant 2 : i32
      %2 = arith.muli %arg6, %c2_i32 : i32
      %c0_i32_1 = arith.constant 0 : i32
      %3 = arith.addi %2, %c0_i32_1 : i32
      %c0 = arith.constant 0 : index
      %c0_2 = arith.constant 0 : index
      %4 = arith.index_cast %3 : i32 to index
      %c0_3 = arith.constant 0 : index
      %5 = tpu.strided_load %arg4[%c0, %c0_2, %4, %c0_3] {strides = array<i32: 1, 1, 1, 2>} : memref<1x4x16x16xf32, #tpu.memory_space<vmem>>, vector<1x4x1x8xf32>
      %6 = vector.shape_cast %5 : vector<1x4x1x8xf32> to vector<4x8xf32>
      %c0_4 = arith.constant 0 : index
      %c0_5 = arith.constant 0 : index
      %c0_6 = arith.constant 0 : index
      %7 = vector.load %arg2[%c0_4, %c0_5, %c0_6] : memref<4x4x4xf32, #tpu.memory_space<vmem>>, vector<1x4x4xf32>
      %8 = vector.shape_cast %7 : vector<1x4x4xf32> to vector<4x4xf32>
      %cst_7 = arith.constant dense<0.000000e+00> : vector<4x8xf32>
      %9 = tpu.matmul %8, %6, %cst_7 {dimension_numbers = #tpu.dot_dimension_numbers<[1], [0], [0], [1], [0, 0, 1, 1], [], []>} : vector<4x4xf32>, vector<4x8xf32>, vector<4x8xf32> -> vector<4x8xf32>
      %10 = arith.addf %1, %9 : vector<4x8xf32>
      %c0_8 = arith.constant 0 : index
      %c0_9 = arith.constant 0 : index
      %11 = arith.index_cast %3 : i32 to index
      %c1 = arith.constant 1 : index
      %12 = tpu.strided_load %arg4[%c0_8, %c0_9, %11, %c1] {strides = array<i32: 1, 1, 1, 2>} : memref<1x4x16x16xf32, #tpu.memory_space<vmem>>, vector<1x4x1x8xf32>
      %13 = vector.shape_cast %12 : vector<1x4x1x8xf32> to vector<4x8xf32>
      %c1_10 = arith.constant 1 : index
      %c0_11 = arith.constant 0 : index
      %c0_12 = arith.constant 0 : index
      %14 = vector.load %arg2[%c1_10, %c0_11, %c0_12] : memref<4x4x4xf32, #tpu.memory_space<vmem>>, vector<1x4x4xf32>
      %15 = vector.shape_cast %14 : vector<1x4x4xf32> to vector<4x4xf32>
      %cst_13 = arith.constant dense<0.000000e+00> : vector<4x8xf32>
      %16 = tpu.matmul %15, %13, %cst_13 {dimension_numbers = #tpu.dot_dimension_numbers<[1], [0], [0], [1], [0, 0, 1, 1], [], []>} : vector<4x4xf32>, vector<4x8xf32>, vector<4x8xf32> -> vector<4x8xf32>
      %17 = arith.addf %10, %16 : vector<4x8xf32>
      %c2_i32_14 = arith.constant 2 : i32
      %18 = arith.muli %arg6, %c2_i32_14 : i32
      %c1_i32_15 = arith.constant 1 : i32
      %19 = arith.addi %18, %c1_i32_15 : i32
      %c0_16 = arith.constant 0 : index
      %c0_17 = arith.constant 0 : index
      %20 = arith.index_cast %19 : i32 to index
      %c0_18 = arith.constant 0 : index
      %21 = tpu.strided_load %arg4[%c0_16, %c0_17, %20, %c0_18] {strides = array<i32: 1, 1, 1, 2>} : memref<1x4x16x16xf32, #tpu.memory_space<vmem>>, vector<1x4x1x8xf32>
      %22 = vector.shape_cast %21 : vector<1x4x1x8xf32> to vector<4x8xf32>
      %c2 = arith.constant 2 : index
      %c0_19 = arith.constant 0 : index
      %c0_20 = arith.constant 0 : index
      %23 = vector.load %arg2[%c2, %c0_19, %c0_20] : memref<4x4x4xf32, #tpu.memory_space<vmem>>, vector<1x4x4xf32>
      %24 = vector.shape_cast %23 : vector<1x4x4xf32> to vector<4x4xf32>
      %cst_21 = arith.constant dense<0.000000e+00> : vector<4x8xf32>
      %25 = tpu.matmul %24, %22, %cst_21 {dimension_numbers = #tpu.dot_dimension_numbers<[1], [0], [0], [1], [0, 0, 1, 1], [], []>} : vector<4x4xf32>, vector<4x8xf32>, vector<4x8xf32> -> vector<4x8xf32>
      %26 = arith.addf %17, %25 : vector<4x8xf32>
      %c0_22 = arith.constant 0 : index
      %c0_23 = arith.constant 0 : index
      %27 = arith.index_cast %19 : i32 to index
      %c1_24 = arith.constant 1 : index
      %28 = tpu.strided_load %arg4[%c0_22, %c0_23, %27, %c1_24] {strides = array<i32: 1, 1, 1, 2>} : memref<1x4x16x16xf32, #tpu.memory_space<vmem>>, vector<1x4x1x8xf32>
      %29 = vector.shape_cast %28 : vector<1x4x1x8xf32> to vector<4x8xf32>
      %c3 = arith.constant 3 : index
      %c0_25 = arith.constant 0 : index
      %c0_26 = arith.constant 0 : index
      %30 = vector.load %arg2[%c3, %c0_25, %c0_26] : memref<4x4x4xf32, #tpu.memory_space<vmem>>, vector<1x4x4xf32>
      %31 = vector.shape_cast %30 : vector<1x4x4xf32> to vector<4x4xf32>
      %cst_27 = arith.constant dense<0.000000e+00> : vector<4x8xf32>
      %32 = tpu.matmul %31, %29, %cst_27 {dimension_numbers = #tpu.dot_dimension_numbers<[1], [0], [0], [1], [0, 0, 1, 1], [], []>} : vector<4x4xf32>, vector<4x8xf32>, vector<4x8xf32> -> vector<4x8xf32>
      %33 = arith.addf %26, %32 : vector<4x8xf32>
      %c0_28 = arith.constant 0 : index
      %c0_29 = arith.constant 0 : index
      %34 = vector.load %arg3[%c0_28, %c0_29] : memref<4x1xf32, #tpu.memory_space<vmem>>, vector<4x1xf32>
      %35 = vector.broadcast %34 : vector<4x1xf32> to vector<4x8xf32>
      %36 = arith.addf %33, %35 : vector<4x8xf32>
      %c0_30 = arith.constant 0 : index
      %c0_31 = arith.constant 0 : index
      %37 = arith.index_cast %arg6 : i32 to index
      %c0_32 = arith.constant 0 : index
      %38 = vector.load %arg5[%c0_30, %c0_31, %37, %c0_32] : memref<1x4x8x8xf32, #tpu.memory_space<vmem>>, vector<1x4x1x8xf32>
      %39 = vector.shape_cast %38 : vector<1x4x1x8xf32> to vector<4x8xf32>
      %40 = vector.shape_cast %36 : vector<4x8xf32> to vector<1x4x1x8xf32>
      tpu.vector_store %arg5[%c0_30, %c0_31, %37, %c0_32], %40 {strides = array<i32>} : memref<1x4x8x8xf32, #tpu.memory_space<vmem>>, vector<1x4x1x8xf32>,
    }
    %c8_i32_0 = arith.constant 8 : i32
    return
  }
  func.func @transform_0(%arg0: i32, %arg1: i32) -> (i32, i32, i32) {
    %c0_i32 = arith.constant 0 : i32
    %c0_i32_0 = arith.constant 0 : i32
    %c0_i32_1 = arith.constant 0 : i32
    %c0_i32_2 = arith.constant 0 : i32
    return %c0_i32, %c0_i32_0, %c0_i32_1 : i32, i32, i32
  }
  func.func @transform_1(%arg0: i32, %arg1: i32) -> (i32, i32) {
    %c0_i32 = arith.constant 0 : i32
    %c0_i32_0 = arith.constant 0 : i32
    %c0_i32_1 = arith.constant 0 : i32
    return %c0_i32, %c0_i32_0 : i32, i32
  }
  func.func @transform_2(%arg0: i32, %arg1: i32) -> (i32, i32, i32, i32) {
    %c0_i32 = arith.constant 0 : i32
    %c0_i32_0 = arith.constant 0 : i32
    %c0_i32_1 = arith.constant 0 : i32
    return %arg0, %c0_i32, %arg1, %c0_i32_0 : i32, i32, i32, i32
  }
  func.func @transform_3(%arg0: i32, %arg1: i32) -> (i32, i32, i32, i32) {
    %c0_i32 = arith.constant 0 : i32
    %c0_i32_0 = arith.constant 0 : i32
    %c0_i32_1 = arith.constant 0 : i32
    return %arg0, %c0_i32, %arg1, %c0_i32_0 : i32, i32, i32, i32
  }
}

module attributes {stable_mosaic.version = 11 : i64} {
  func.func @_conv1x1t_kernel(%arg0: i32, %arg1: i32, %arg2: memref<4x16xf32, #tpu.memory_space<vmem>>, %arg3: memref<4x1xf32, #tpu.memory_space<vmem>>, %arg4: memref<1x16x64xf32, #tpu.memory_space<vmem>>, %arg5: memref<1x4x64xf32, #tpu.memory_space<vmem>>) attributes {dimension_semantics = [#tpu.dimension_semantics<parallel>, #tpu.dimension_semantics<parallel>], iteration_bounds = array<i64: 2, 1>, scalar_prefetch = 0 : i64, scratch_operands = 0 : i64, tpu.core_type = #tpu.core_type<tc>, window_params = [{pipeline_mode = #tpu.pipeline_mode<synchronous>, transform_indices = @transform_0, window_bounds = array<i64: 4, 16>}, {pipeline_mode = #tpu.pipeline_mode<synchronous>, transform_indices = @transform_1, window_bounds = array<i64: 4, 1>}, {transform_indices = @transform_2, window_bounds = array<i64: 1, 16, 64>}, {transform_indices = @transform_3, window_bounds = array<i64: 1, 4, 64>}]} {
    %c0 = arith.constant 0 : index
    %c0_0 = arith.constant 0 : index
    %0 = vector.load %arg2[%c0, %c0_0] : memref<4x16xf32, #tpu.memory_space<vmem>>, vector<4x16xf32>
    %c0_1 = arith.constant 0 : index
    %c0_2 = arith.constant 0 : index
    %c0_3 = arith.constant 0 : index
    %1 = vector.load %arg4[%c0_1, %c0_2, %c0_3] : memref<1x16x64xf32, #tpu.memory_space<vmem>>, vector<1x16x64xf32>
    %2 = vector.shape_cast %1 : vector<1x16x64xf32> to vector<16x64xf32>
    %cst = arith.constant dense<0.000000e+00> : vector<4x64xf32>
    %3 = tpu.matmul %0, %2, %cst {dimension_numbers = #tpu.dot_dimension_numbers<[1], [0], [0], [1], [0, 0, 1, 1], [], []>} : vector<4x16xf32>, vector<16x64xf32>, vector<4x64xf32> -> vector<4x64xf32>
    %c0_4 = arith.constant 0 : index
    %c0_5 = arith.constant 0 : index
    %4 = vector.load %arg3[%c0_4, %c0_5] : memref<4x1xf32, #tpu.memory_space<vmem>>, vector<4x1xf32>
    %5 = vector.broadcast %4 : vector<4x1xf32> to vector<4x64xf32>
    %6 = arith.addf %3, %5 : vector<4x64xf32>
    %c0_6 = arith.constant 0 : index
    %c0_7 = arith.constant 0 : index
    %c0_8 = arith.constant 0 : index
    %7 = vector.load %arg5[%c0_6, %c0_7, %c0_8] : memref<1x4x64xf32, #tpu.memory_space<vmem>>, vector<1x4x64xf32>
    %8 = vector.shape_cast %7 : vector<1x4x64xf32> to vector<4x64xf32>
    %9 = vector.shape_cast %6 : vector<4x64xf32> to vector<1x4x64xf32>
    tpu.vector_store %arg5[%c0_6, %c0_7, %c0_8], %9 {strides = array<i32>} : memref<1x4x64xf32, #tpu.memory_space<vmem>>, vector<1x4x64xf32>,
    return
  }
  func.func @transform_0(%arg0: i32, %arg1: i32) -> (i32, i32) {
    %c0_i32 = arith.constant 0 : i32
    %c0_i32_0 = arith.constant 0 : i32
    %c0_i32_1 = arith.constant 0 : i32
    return %c0_i32, %c0_i32_0 : i32, i32
  }
  func.func @transform_1(%arg0: i32, %arg1: i32) -> (i32, i32) {
    %c0_i32 = arith.constant 0 : i32
    %c0_i32_0 = arith.constant 0 : i32
    %c0_i32_1 = arith.constant 0 : i32
    return %c0_i32, %c0_i32_0 : i32, i32
  }
  func.func @transform_2(%arg0: i32, %arg1: i32) -> (i32, i32, i32) {
    %c0_i32 = arith.constant 0 : i32
    %c0_i32_0 = arith.constant 0 : i32
    return %arg0, %c0_i32, %arg1 : i32, i32, i32
  }
  func.func @transform_3(%arg0: i32, %arg1: i32) -> (i32, i32, i32) {
    %c0_i32 = arith.constant 0 : i32
    %c0_i32_0 = arith.constant 0 : i32
    return %arg0, %c0_i32, %arg1 : i32, i32, i32
  }
}

</mosaic_0001>

<llo_original>
// kernel: tpu_custom_call.1
$region0: #{tpu_custom_call.1}
  #allocation0 [shape = 'u32[]', space=smem, size = 0x4, offset = 0x4, fixed_abs, tag = 'smem constant byte address 0x4 - core index']
  #allocation1 [shape = 'u32[144,128]{1,0:T(1,128)}', space=vmem, size = 0x12000, scoped, tag = 'internal scratch']
  %s0 = inlined_call_operand.vmem [shape: f32[4,16], index: 0, kind: input, shape index: {}]
  %s1 = inlined_call_operand.vmem [shape: f32[4,1], index: 1, kind: input, shape index: {}]
  %s2 = inlined_call_operand.hbm [shape: f32[2,16,64], index: 2, kind: input, shape index: {}]
  %s3 = inlined_call_operand.hbm [shape: f32[2,4,64], index: 3, kind: output, shape index: {}]
  %s4 = sld [smem:[#allocation0]]
  $region49: #{tpu_custom_call.1} parent=0
    _
  %s6 = ssub.s32 1, %s4
  %s7 = scalar_select 0, %s6, %s4
  $region1: #{tpu_custom_call.1} parent=0
    #allocation2 [shape = 'u8[16384]{0}', space=vmem, size = 0x4000, scoped, tag = 'input window, operand 2']
    #allocation3 [shape = 's32[2]{0}', space=sflag, size = 0x8, scoped, tag = 'scoped memory for tpu_custom_call.1']
    #allocation4 [shape = 's32[2]{0}', space=sflag, size = 0x8, scoped, tag = 'scoped memory for tpu_custom_call.1']
    #allocation5 [shape = 'u8[4096]{0}', space=vmem, size = 0x1000, scoped, tag = 'output window, operand 0']
    %8 = vsyncpa [#allocation3], 0
    %s9 = scalar_lea.sflag [#allocation3], 1
    %10 = vsyncpa %s9, 0
    %11 = vsyncpa [#allocation4], 0
    %s12 = scalar_lea.sflag [#allocation4], 1
    %13 = vsyncpa %s12, 0
    loop: start=0, step=1, limit=4
    $region2: #{tpu_custom_call.1} parent=1 // loop_pre_header
      _
    $region3: #{tpu_custom_call.1} parent=1 // loop_header
      %s15 = sphi 0, %s19
      %p16 = scmp.ge.s32.totalorder %s15, 4
      %s22 = sphi 0, %s34
      %s23 = sphi 0, %s30
      %s24 = sphi 0, %s22
      %s25 = sphi 0, %s23
      %s26 = sphi 0, %s24
      %s27 = sphi 0, %s25
      %s35 = sphi 0, %s35
      %s37 = sphi 0, %s35
      %s38 = sphi 0, %s37
      %s52 = sphi 0, %s38
      %s56 = sphi 0, %s56
      %s58 = sphi 0, %s56
      %s59 = sphi 0, %s58
      %s73 = sphi 0, %s59
      %s81 = sphi 0, %s83
      %s84 = sphi 0, %s81
      %s85 = sphi 0, %s84
      %s101 = sphi 0, %s85
      %s109 = sphi 0, %s111
      %s112 = sphi 0, %s109
      %s113 = sphi 0, %s112
      %s129 = sphi 0, %s113
    $region4: #{tpu_custom_call.1} parent=1 // loop_header_branch
      %18 = sbr.rel (%p16) target = $region8
    $region5: #{tpu_custom_call.1} parent=1 // loop_body
      %s20 = ssub.s32 %s15, 1
      %s21 = ssub.s32 %s15, 2
      %s28 = sadd.s32 1, %s23
      %p29 = scmp.ge.s32.totalorder %s28, 1
      %s30 = scalar_select %p29, 0, %s28
      %s31 = sadd.s32 1, %s22
      %s32 = scalar_select %p29, %s31, %s22
      %p33 = scmp.ge.s32.totalorder %s32, 2
      %s34 = scalar_select %p33, 0, %s32
      %s36 = sadd.s32 %s35, 1
      %p39 = scmp.eq.s32.totalorder %s15, 1
      %p40 = scmp.ne.s32.totalorder %s35, %s37
      %p41 = scmp.eq.s32.totalorder %s15, 0
      %p42 = por %p40, %p41
      %p43 = scmp.ne.s32.totalorder %s35, %s37
      %p44 = scmp.eq.s32.totalorder %s20, 1
      %p45 = por %p43, %p44
      %p46 = scmp.ne.s32.totalorder %s37, %s38
      %p47 = scmp.eq.s32.totalorder %s20, 0
      %p48 = por %p46, %p47
      %p49 = scmp.ne.s32.totalorder %s37, %s38
      %p50 = scmp.eq.s32.totalorder %s21, 1
      %p51 = por %p49, %p50
      %p53 = scmp.ne.s32.totalorder %s38, %s52
      %p54 = scmp.eq.s32.totalorder %s21, 0
      %p55 = por %p53, %p54
      %s57 = sadd.s32 %s56, 1
      %p60 = scmp.eq.s32.totalorder %s15, 1
      %p61 = scmp.ne.s32.totalorder %s56, %s58
      %p62 = scmp.eq.s32.totalorder %s15, 0
      %p63 = por %p61, %p62
      %p64 = scmp.ne.s32.totalorder %s56, %s58
      %p65 = scmp.eq.s32.totalorder %s20, 1
      %p66 = por %p64, %p65
      %p67 = scmp.ne.s32.totalorder %s58, %s59
      %p68 = scmp.eq.s32.totalorder %s20, 0
      %p69 = por %p67, %p68
      %p70 = scmp.ne.s32.totalorder %s58, %s59
      %p71 = scmp.eq.s32.totalorder %s21, 1
      %p72 = por %p70, %p71
      %p74 = scmp.ne.s32.totalorder %s59, %s73
      %p75 = scmp.eq.s32.totalorder %s21, 0
      %p76 = por %p74, %p75
      %s77 = ssub.s32 %s22, %s34
      %s78 = ssub.s32 %s23, %s30
      %s79 = sor.u32 %s77, %s78
      %p80 = scmp.eq.s32.totalorder %s79, 0
      %s82 = sadd.s32 %s81, 1
      %s83 = scalar_select %p80, %s81, %s82
      %p86 = pneg %p80
      %p87 = scmp.eq.s32.totalorder %s15, 1
      %p88 = por %p86, %p87
      %p89 = scmp.ne.s32.totalorder %s81, %s84
      %p90 = scmp.eq.s32.totalorder %s15, 0
      %p91 = por %p89, %p90
      %p92 = scmp.ne.s32.totalorder %s81, %s84
      %p93 = scmp.eq.s32.totalorder %s20, 1
      %p94 = por %p92, %p93
      %p95 = scmp.ne.s32.totalorder %s84, %s85
      %p96 = scmp.eq.s32.totalorder %s20, 0
      %p97 = por %p95, %p96
      %p98 = scmp.ne.s32.totalorder %s84, %s85
      %p99 = scmp.eq.s32.totalorder %s21, 1
      %p100 = por %p98, %p99
      %p102 = scmp.ne.s32.totalorder %s85, %s101
      %p103 = scmp.eq.s32.totalorder %s21, 0
      %p104 = por %p102, %p103
      %s105 = ssub.s32 %s22, %s34
      %s106 = ssub.s32 %s23, %s30
      %s107 = sor.u32 %s105, %s106
      %p108 = scmp.eq.s32.totalorder %s107, 0
      %s110 = sadd.s32 %s109, 1
      %s111 = scalar_select %p108, %s109, %s110
      %p114 = pneg %p108
      %p115 = scmp.eq.s32.totalorder %s15, 1
      %p116 = por %p114, %p115
      %p117 = scmp.ne.s32.totalorder %s109, %s112
      %p118 = scmp.eq.s32.totalorder %s15, 0
      %p119 = por %p117, %p118
      %p120 = scmp.ne.s32.totalorder %s109, %s112
      %p121 = scmp.eq.s32.totalorder %s20, 1
      %p122 = por %p120, %p121
      %p123 = scmp.ne.s32.totalorder %s112, %s113
      %p124 = scmp.eq.s32.totalorder %s20, 0
      %p125 = por %p123, %p124
      %p126 = scmp.ne.s32.totalorder %s112, %s113
      %p127 = scmp.eq.s32.totalorder %s21, 1
      %p128 = por %p126, %p127
      %p130 = scmp.ne.s32.totalorder %s113, %s129
      %p131 = scmp.eq.s32.totalorder %s21, 0
      %p132 = por %p130, %p131
      %p133 = scmp.le.s32.totalorder 1, %s15
      %p134 = scmp.lt.s32.totalorder %s15, 3
      %p135 = pnand %p133, %p134
      %p136 = pneg %p135
      // Predicated region
      $region9: #{tpu_custom_call.1} parent=5 // pred_check
        _
      $region10: #{tpu_custom_call.1} parent=5 // pred_check_branch
        %138 = sbr.rel (%p135) target = $region12
      $region11: #{tpu_custom_call.1} parent=5 // pred_region
        %s139 = ssub.s32 %s15, 1
        // Predicated region
        $region13: #{tpu_custom_call.1} parent=11 // pred_check
          %p140 = pneg %p48
        $region14: #{tpu_custom_call.1} parent=11 // pred_check_branch
          %142 = sbr.rel (%p140) target = $region16
        $region15: #{tpu_custom_call.1} parent=11 // pred_region
          _
        $region16: #{tpu_custom_call.1} parent=11 // pred_fallthru
          _
        // Predicated region
        $region17: #{tpu_custom_call.1} parent=11 // pred_check
          %p143 = pneg %p69
        $region18: #{tpu_custom_call.1} parent=11 // pred_check_branch
          %145 = sbr.rel (%p143) target = $region20
        $region19: #{tpu_custom_call.1} parent=11 // pred_region
          _
        $region20: #{tpu_custom_call.1} parent=11 // pred_fallthru
          _
      $region12: #{tpu_custom_call.1} parent=5 // pred_fallthru
        _
      %p146 = scmp.lt.s32.totalorder %s15, 2
      // Predicated region
      $region21: #{tpu_custom_call.1} parent=5 // pred_check
        %p147 = pneg %p146
      $region22: #{tpu_custom_call.1} parent=5 // pred_check_branch
        %149 = sbr.rel (%p147) target = $region24
      $region23: #{tpu_custom_call.1} parent=5 // pred_region
        // Predicated region
        $region25: #{tpu_custom_call.1} parent=23 // pred_check
          %p150 = pneg %p91
        $region26: #{tpu_custom_call.1} parent=23 // pred_check_branch
          %152 = sbr.rel (%p150) target = $region28
        $region27: #{tpu_custom_call.1} parent=23 // pred_region
          %s153 = sand.u32 %s81, 1
          %s154 = scalar_lea.sflag [#allocation3], %s153
          %s155 = sand.u32 %s81, 1
          %s156 = smul.addr %s155, 16
          %s157 = scalar_lea.vmem [#allocation2], %s156
          %s159 = ssub.s32 256, 256
          %160 = vsyncadd %s154, %s159
          %s161 = smul.addr %s22, 2
          %s162 = sadd.s32 %s23, %s161
          %s163 = smul.addr %s162, 128
          %s164 = scalar_lea.hbm %s2, %s163
          %s165 = sshll.u32 %s157, 4
          %s166 = int_to_ptr.vmem [resolvable:$true] %s165
          %171 = dma.hbm_to_vmem [thread:$0]  %s164, 256, %s166, %s154, 128, 128, 8
        $region28: #{tpu_custom_call.1} parent=23 // pred_fallthru
          _
      $region24: #{tpu_custom_call.1} parent=5 // pred_fallthru
        _
      %p172 = scmp.le.s32.totalorder 1, %s15
      %p173 = scmp.lt.s32.totalorder %s15, 3
      %p174 = pnand %p172, %p173
      %p175 = pneg %p174
      // Predicated region
      $region29: #{tpu_custom_call.1} parent=5 // pred_check
        _
      $region30: #{tpu_custom_call.1} parent=5 // pred_check_branch
        %177 = sbr.rel (%p174) target = $region32
      $region31: #{tpu_custom_call.1} parent=5 // pred_region
        %s178 = ssub.s32 %s15, 1
        %s179 = sand.u32 %s84, 1
        %s180 = scalar_lea.sflag [#allocation3], %s179
        %s181 = sand.u32 %s84, 1
        %s182 = smul.addr %s181, 16
        %s183 = scalar_lea.vmem [#allocation2], %s182
        // Predicated region
        $region33: #{tpu_custom_call.1} parent=31 // pred_check
          %p184 = pneg %p97
        $region34: #{tpu_custom_call.1} parent=31 // pred_check_branch
          %186 = sbr.rel (%p184) target = $region36
        $region35: #{tpu_custom_call.1} parent=31 // pred_region
          %187 = dma.done %s180, 256
        $region36: #{tpu_custom_call.1} parent=31 // pred_fallthru
          _
        %p188 = pneg %p48
        %p189 = pneg %p45
        %p190 = pneg %p69
        %p191 = pneg %p66
        %s192 = sand.u32 %s84, 1
        %s193 = scalar_lea.sflag [#allocation3], %s192
        %s194 = sand.u32 %s84, 1
        %s195 = smul.addr %s194, 16
        %s196 = scalar_lea.vmem [#allocation2], %s195
        %p197 = pneg %p97
        %p198 = pneg %p94
        %p199 = pneg %p125
        %p200 = pneg %p122
        %s201 = sand.u32 %s112, 1
        %s202 = scalar_lea.sflag [#allocation4], %s201
        %s203 = sand.u32 %s112, 1
        %s204 = smul.addr %s203, 4
        %s205 = scalar_lea.vmem [#allocation5], %s204
        %v206 = vld [vmem:[%s0] sm:$0xf]
        %v207 = vld [vmem:[%s183] sm:$0xff]
        %v208 = vld [vmem:[%s183 + $0x8] sm:$0xff]
        %v209 = vld [vmem:[%s1] sm:$0xf]
        %211 = vset.pattern.permute.xlu0 0
        %212 = vperm.xlu0 %211, %v209
        %v213 = vpop.permute.xlu0 %212
        %vm215 = vcmask 130048
        %v217 = vsel %vm215, %v206, 0
        %219 = vmatprep.subr.mxu0 0.0
        %220 = vmatpush1.msra.mxu0 0.0
        %221 = vmatprep.subr.mxu0 0.0
        %222 = vmatpush1.msra.mxu0 0.0
        %223 = vmatprep.subr.mxu0 0.0
        %224 = vmatpush1.msra.mxu0 0.0
        %225 = vmatprep.subr.mxu0 0.0
        %226 = vmatpush1.msra.mxu0 0.0
        %227 = vmatprep.subr.mxu0 0.0
        %228 = vmatpush1.msra.mxu0 0.0
        %229 = vmatprep.subr.mxu0 0.0
        %230 = vmatpush1.msra.mxu0 0.0
        %231 = vmatprep.subr.mxu0 0.0
        %232 = vmatpush1.msra.mxu0 0.0
        %233 = vmatprep.subr.mxu0 0.0
        %234 = vmatpush1.msra.mxu0 0.0
        %235 = vmatprep.subr.mxu0 0.0
        %236 = vmatpush1.msra.mxu0 0.0
        %237 = vmatprep.subr.mxu0 0.0
        %238 = vmatpush1.msra.mxu0 0.0
        %239 = vmatprep.subr.mxu0 0.0
        %240 = vmatpush1.msra.mxu0 0.0
        %241 = vmatprep.subr.mxu0 0.0
        %242 = vmatpush1.msra.mxu0 0.0
        %243 = vmatprep.subr.mxu0 0.0
        %244 = vmatpush1.msra.mxu0 0.0
        %245 = vmatprep.subr.mxu0 0.0
        %246 = vmatpush1.msra.mxu0 0.0
        %247 = vmatprep.subr.mxu0 0.0
        %248 = vmatpush1.msra.mxu0 %v208
        %249 = vmatprep.subr.mxu0 0.0
        %250 = vmatpush1.msra.mxu0 %v207
        %251 = vmatprep.subr.mxu0 0.0
        %252 = vmatpush2.msra.mxu0 0.0
        %253 = vmatprep.subr.mxu0 0.0
        %254 = vmatpush2.msra.mxu0 0.0
        %255 = vmatprep.subr.mxu0 0.0
        %256 = vmatpush2.msra.mxu0 0.0
        %257 = vmatprep.subr.mxu0 0.0
        %258 = vmatpush2.msra.mxu0 0.0
        %259 = vmatprep.subr.mxu0 0.0
        %260 = vmatpush2.msra.mxu0 0.0
        %261 = vmatprep.subr.mxu0 0.0
        %262 = vmatpush2.msra.mxu0 0.0
        %263 = vmatprep.subr.mxu0 0.0
        %264 = vmatpush2.msra.mxu0 0.0
        %265 = vmatprep.subr.mxu0 0.0
        %266 = vmatpush2.msra.mxu0 0.0
        %267 = vmatprep.subr.mxu0 0.0
        %268 = vmatpush2.msra.mxu0 0.0
        %269 = vmatprep.subr.mxu0 0.0
        %270 = vmatpush2.msra.mxu0 0.0
        %271 = vmatprep.subr.mxu0 0.0
        %272 = vmatpush2.msra.mxu0 0.0
        %273 = vmatprep.subr.mxu0 0.0
        %274 = vmatpush2.msra.mxu0 0.0
        %275 = vmatprep.subr.mxu0 0.0
        %276 = vmatpush2.msra.mxu0 0.0
        %277 = vmatprep.subr.mxu0 0.0
        %278 = vmatpush2.msra.mxu0 0.0
        %279 = vmatprep.subr.mxu0 0.0
        %280 = vmatpush2.msra.mxu0 0.0
        %281 = vmatprep.subr.mxu0 0.0
        %282 = vmatpush2.msra.mxu0 0.0
        %283 = vmatprep.mubr.f32.mxu0 0.0
        %284 = vmatmul.mubr.f32.gmra.mxu0 %v217
        %v285 = vpop.f32.mrf.mxu0
        %v286 = vadd.f32 %v213, %v285
        %v287 = vpop.f32.mrf.mxu0
        %288 = vdwg.mxu0
        %vm289 = vcmask 519168
        %290 = vst.msk [vmem:[%s205] sm:$0xf] %vm289, %v286
        %s291 = sand.u32 %s112, 1
        %s292 = scalar_lea.sflag [#allocation4], %s291
        %s293 = sand.u32 %s112, 1
        %s294 = smul.addr %s293, 4
        %s295 = scalar_lea.vmem [#allocation5], %s294
        // Predicated region
        $region37: #{tpu_custom_call.1} parent=31 // pred_check
          %p296 = pneg %p122
        $region38: #{tpu_custom_call.1} parent=31 // pred_check_branch
          %298 = sbr.rel (%p296) target = $region40
        $region39: #{tpu_custom_call.1} parent=31 // pred_region
          %s300 = ssub.s32 64, 64
          %301 = vsyncadd %s292, %s300
          %s302 = sadd.s32 %s25, %s24
          %s303 = smul.addr %s302, 64
          %s304 = scalar_lea.hbm %s3, %s303
          %s306 = sshll.u32 %s295, 4
          %s307 = int_to_ptr.vmem [resolvable:$true] %s306
          %309 = dma.vmem_to_hbm [thread:$0]  %s307, 64, %s304, %s292
        $region40: #{tpu_custom_call.1} parent=31 // pred_fallthru
          _
      $region32: #{tpu_custom_call.1} parent=5 // pred_fallthru
        _
      %p310 = scmp.le.s32.totalorder 2, %s15
      // Predicated region
      $region41: #{tpu_custom_call.1} parent=5 // pred_check
        %p311 = pneg %p310
      $region42: #{tpu_custom_call.1} parent=5 // pred_check_branch
        %313 = sbr.rel (%p311) target = $region44
      $region43: #{tpu_custom_call.1} parent=5 // pred_region
        %s314 = ssub.s32 %s15, 2
        // Predicated region
        $region45: #{tpu_custom_call.1} parent=43 // pred_check
          %p315 = pneg %p128
        $region46: #{tpu_custom_call.1} parent=43 // pred_check_branch
          %317 = sbr.rel (%p315) target = $region48
        $region47: #{tpu_custom_call.1} parent=43 // pred_region
          %s318 = sand.u32 %s113, 1
          %s319 = scalar_lea.sflag [#allocation4], %s318
          %s320 = sand.u32 %s113, 1
          %s321 = smul.addr %s320, 4
          %s322 = scalar_lea.vmem [#allocation5], %s321
          %323 = dma.done %s319, 64
        $region48: #{tpu_custom_call.1} parent=43 // pred_fallthru
          _
      $region44: #{tpu_custom_call.1} parent=5 // pred_fallthru
        _
    $region6: #{tpu_custom_call.1} parent=1 // loop_footer
      %s19 = sadd.s32 1, %s15
    $region7: #{tpu_custom_call.1} parent=1 // loop_footer_branch
      %14 = sbr.rel target = $region3
    $region8: #{tpu_custom_call.1} parent=1 // loop_exit
      _
    %324 = vsyncpa [#allocation3], 1
    %s325 = scalar_lea.sflag [#allocation3], 1
    %326 = vsyncpa %s325, 1
    %327 = vsyncpa [#allocation4], 1
    %s328 = scalar_lea.sflag [#allocation4], 1
    %329 = vsyncpa %s328, 1

</llo_original>
